<compile_context>
chip_gen: v7x
topology: tpu7x:2x2x1
jax: 0.10.0
libtpu: 0.0.40
codegen_flags: <defaults>
</compile_context>

<pallas_src>
import functools
import math

import jax
import jax.numpy as jnp
from jax.experimental import pallas as pl
from jax.experimental.pallas import tpu as pltpu


def _round_up(n, m):
    return ((n + m - 1) // m) * m


def _cdiv(a, b):
    return (a + b - 1) // b


# ----------------------------- Pallas kernel --------------------------------

def _critic_kernel(*refs):
    """One batch tile of the fused Critic MLP.

    refs = (x_ref, w0, b0, w1, b1, ..., w_out_row, b_out, o_ref)
      x_ref:     (tb, o_size)   activation tile (streamed, unpadded feature dim)
      w_i:       (in, out_pad)  hidden weights (VMEM-resident; in = o_size for
                                layer 0, previous padded width afterwards)
      b_i:       (1, out_pad)   hidden biases, f32 (VMEM-resident)
      w_out_row: (1, h_pad)     output weight stored as a lane row
      b_out:     (1, 1)         f32
      o_ref:     (1, tb)        lane-packed output row: one value per lane
    """
    x_ref = refs[0]
    o_ref = refs[-1]
    params = refs[1:-1]
    n_linear = len(params) // 2  # hidden layers + output layer

    h = x_ref[...]
    # Hidden layers: MXU matmul with f32 accumulate + f32 VPU epilogue
    # (bias + leaky_relu).  Epilogue stays f32 -> correct on v5e's non-bf16 VPU
    # even when the MXU operands are bf16.
    for i in range(n_linear - 1):
        w = params[2 * i][...]                              # MXU operand dtype
        b = params[2 * i + 1][...]                          # (1, out_pad) f32
        h = jnp.dot(h.astype(w.dtype), w,
                    preferred_element_type=jnp.float32) + b
        h = jnp.maximum(h, 0.01 * h)                        # leaky_relu (0.01)

    # Output layer (h_pad -> 1), lane-packed: contract the feature axis of the
    # (1, h_pad) weight row against the feature axis of h -> (1, tb).  The
    # result already has batch along lanes, so the store is lane-dense and the
    # HBM writeback is only 4 B per batch row.
    w_out = params[-2][...]                                 # (1, h_pad)
    b_out = params[-1][...]                                 # (1, 1) f32
    v_row = jax.lax.dot_general(
        w_out, h.astype(w_out.dtype),
        dimension_numbers=(((1,), (1,)), ((), ())),
        preferred_element_type=jnp.float32) + b_out         # (1, tb)
    o_ref[...] = v_row.astype(o_ref.dtype)


# --------------------------------- wrapper -----------------------------------

@functools.partial(jax.jit, static_argnames=("tile_batch", "mxu_dtype"))
def critic_forward(x, params, *, tile_batch=512, mxu_dtype=jnp.bfloat16):
    """Fused Critic forward pass.

    x:      (batch, o_size) float32
    params: [(W_0, b_0), ..., (W_{L-1}, b_{L-1}), (W_out, b_out)]
            hidden W_i: (in, out), b_i: (1, out); output W_out: (h_size, 1),
            b_out: (1, 1).   (x @ W + b, equivalent to PyTorch x @ W.T + b.)
    tile_batch: target rows per grid step (sweep 512 -> 1024/2048 when the
            per-generation VMEM budget allows).
    mxu_dtype:  dtype the MXU operands are streamed/stored in (default bf16 —
            halves HBM activation traffic and uses the single-pass bf16 MXU on
            v6e/v7x); accumulation and the elementwise epilogue stay f32.
            Pass None for a pure-f32 path.
    Returns (batch, 1), dtype of x.
    """
    batch, o_size = x.shape
    out_dtype = x.dtype
    compute_dtype = jnp.dtype(mxu_dtype) if mxu_dtype is not None else jnp.dtype(jnp.float32)

    # --- batch tiling ---------------------------------------------------------
    # >= 2 tiles for moderate batches (v7x megacore), tile derived from the
    # batch so the padded tail stays < 128 rows where possible.
    if batch <= 256:
        tb = _round_up(batch, 8)
        num_tiles = 1
    else:
        num_tiles = max(2, _cdiv(batch, tile_batch))
        tb = _round_up(_cdiv(batch, num_tiles), 128)
        num_tiles = _cdiv(batch, tb)
    batch_pad = num_tiles * tb

    # --- activations: cast first (narrow pad writes), pad batch rows only -----
    xp = x.astype(compute_dtype)
    if batch_pad != batch:
        xp = jnp.pad(xp, ((0, batch_pad - batch), (0, 0)))

    flat = []
    in_specs = [pl.BlockSpec((tb, o_size), lambda i: (i, 0))]

    # --- hidden layers: pad only the weights (VMEM-resident, constant maps) ---
    weight_bytes = 0
    max_width = 128
    prev_width = o_size                      # layer-0 contraction dim unpadded
    for w, b in params[:-1]:
        fi, fo = w.shape
        fo_p = _round_up(fo, 128)
        wp = jnp.pad(w, ((0, prev_width - fi), (0, fo_p - fo))).astype(compute_dtype)
        bp = jnp.pad(b, ((0, 0), (0, fo_p - fo))).astype(jnp.float32)
        flat += [wp, bp]
        in_specs += [
            pl.BlockSpec((prev_width, fo_p), lambda i: (0, 0)),
            pl.BlockSpec((1, fo_p), lambda i: (0, 0)),
        ]
        weight_bytes += wp.size * wp.dtype.itemsize + bp.size * 4
        prev_width = fo_p
        max_width = max(max_width, fo_p)

    # --- output layer: (h, 1) weight stored as a lane-dense (1, h_pad) row ----
    w_out, b_out = params[-1]
    h_size = w_out.shape[0]
    w_out_row = jnp.pad(w_out.reshape(1, h_size),
                        ((0, 0), (0, prev_width - h_size))).astype(compute_dtype)
    b_out_f32 = b_out.astype(jnp.float32)
    flat += [w_out_row, b_out_f32]
    in_specs += [
        pl.BlockSpec((1, prev_width), lambda i: (0, 0)),
        pl.BlockSpec((1, 1), lambda i: (0, 0)),
    ]
    weight_bytes += w_out_row.size * w_out_row.dtype.itemsize + 4

    # --- weight residency guard (v7x has only 64 MiB VMEM per TensorCore) -----
    if 2 * weight_bytes > 40 * (1 << 20):
        # TODO(synk): hidden-dim ("arbitrary") grid axis with an f32 VMEM
        # accumulator instead of full weight residency; XLA fallback for now.
        return critic_forward_ref(x, params).astype(out_dtype)

    # --- explicit scoped-VMEM budget (defaults are only 16/32 MiB) ------------
    dsize = compute_dtype.itemsize
    act_tile_bytes = tb * o_size * dsize          # streamed input tile
    out_tile_bytes = tb * 4                       # lane-packed output row
    interm_bytes = 4 * tb * max_width * 4         # a few live f32 copies of h
    vmem_needed = (2 * (weight_bytes + act_tile_bytes + out_tile_bytes)
                   + interm_bytes + (2 << 20))
    vmem_limit = int(min(max(vmem_needed, 32 * (1 << 20)), 48 * (1 << 20)))

    out = pl.pallas_call(
        _critic_kernel,
        out_shape=jax.ShapeDtypeStruct((1, batch_pad), jnp.float32),
        grid=(num_tiles,),
        in_specs=in_specs,
        out_specs=pl.BlockSpec((1, tb), lambda i: (0, i)),
        compiler_params=pltpu.CompilerParams(
            dimension_semantics=("parallel",),    # shard batch tiles over TCs (v7x)
            vmem_limit_bytes=vmem_limit,
        ),
    )(xp, *flat)

    return out[0, :batch][:, None].astype(out_dtype)


# ------------------------- deterministic parameter init ----------------------

def _xavier_uniform(key, fan_in, fan_out, gain):
    bound = gain * math.sqrt(6.0 / (fan_in + fan_out))
    # Stored as (in, out) so the forward computes x @ W.
    return jax.random.uniform(
        key, (fan_in, fan_out), dtype=jnp.float32, minval=-bound, maxval=bound
    )


def make_critic_params(key, o_size, h_size, h_layers):
    gain_tanh = 5.0 / 3.0   # torch.nn.init.calculate_gain('tanh')
    gain_linear = 1.0       # torch.nn.init.calculate_gain('linear')
    keys = jax.random.split(key, h_layers + 1)
    params = []
    # hidden[0]: o_size -> h_size
    params.append((_xavier_uniform(keys[0], o_size, h_size, gain_tanh),
                   jnp.zeros((1, h_size), jnp.float32)))
    # hidden[1:]: h_size -> h_size
    for i in range(1, h_layers):
        params.append((_xavier_uniform(keys[i], h_size, h_size, gain_tanh),
                       jnp.zeros((1, h_size), jnp.float32)))
    # output: h_size -> 1
    params.append((_xavier_uniform(keys[h_layers], h_size, 1, gain_linear),
                   jnp.zeros((1, 1), jnp.float32)))
    return params


# ------------------------------ reference (pure JAX) --------------------------

def critic_forward_ref(x, params):
    h = x
    for w, b in params[:-1]:
        h = jnp.dot(h, w, precision=jax.lax.Precision.HIGHEST) + b
        h = jnp.where(h > 0, h, 0.01 * h)
    w, b = params[-1]
    return jnp.dot(h, w, precision=jax.lax.Precision.HIGHEST) + b


# ---------------------------------- main --------------------------------------

if __name__ == "__main__":
    batch = 8
    o_size = 32
    h_size = 32
    h_layers = 2

    key = jax.random.PRNGKey(0)
    k_x, k_p = jax.random.split(key)

    x = jax.random.normal(k_x, (batch, o_size), dtype=jnp.float32)
    params = make_critic_params(k_p, o_size, h_size, h_layers)
    ref = critic_forward_ref(x, params)

    # f32 path (matches the PyTorch module's numerics closely).
    out_f32 = jax.block_until_ready(critic_forward(x, params, mxu_dtype=None))
    assert out_f32.shape == (batch, 1), out_f32.shape
    assert jnp.allclose(out_f32, ref, atol=1e-4, rtol=1e-4), (out_f32, ref)

    # default bf16 MXU streaming path; accumulation + epilogue stay f32.
    out_bf16 = jax.block_until_ready(critic_forward(x, params))
    assert out_bf16.shape == (batch, 1), out_bf16.shape
    assert jnp.allclose(out_bf16, ref, atol=0.2, rtol=0.05), (out_bf16, ref)

    # multi-tile batch exercises the lane-packed output + batch tiling path.
    xb = jax.random.normal(jax.random.PRNGKey(1), (1300, o_size), jnp.float32)
    refb = critic_forward_ref(xb, params)
    outb = jax.block_until_ready(critic_forward(xb, params, tile_batch=512))
    assert outb.shape == (1300, 1), outb.shape
    assert jnp.allclose(outb, refb, atol=0.2, rtol=0.05)

    print("KERNEL_OK")
</pallas_src>

<mosaic_0001>
module attributes {stable_mosaic.version = 11 : i64} {
  func.func @_critic_kernel(%arg0: i32, %arg1: memref<8x32xf32, #tpu.memory_space<vmem>>, %arg2: memref<32x128xf32, #tpu.memory_space<vmem>>, %arg3: memref<1x128xf32, #tpu.memory_space<vmem>>, %arg4: memref<128x128xf32, #tpu.memory_space<vmem>>, %arg5: memref<1x128xf32, #tpu.memory_space<vmem>>, %arg6: memref<1x128xf32, #tpu.memory_space<vmem>>, %arg7: memref<1x1xf32, #tpu.memory_space<vmem>>, %arg8: memref<1x8xf32, #tpu.memory_space<vmem>>) attributes {dimension_semantics = [#tpu.dimension_semantics<parallel>], iteration_bounds = array<i64: 1>, scalar_prefetch = 0 : i64, scratch_operands = 0 : i64, tpu.core_type = #tpu.core_type<tc>, window_params = [{transform_indices = @transform_0, window_bounds = array<i64: 8, 32>}, {pipeline_mode = #tpu.pipeline_mode<synchronous>, transform_indices = @transform_1, window_bounds = array<i64: 32, 128>}, {pipeline_mode = #tpu.pipeline_mode<synchronous>, transform_indices = @transform_2, window_bounds = array<i64: 1, 128>}, {pipeline_mode = #tpu.pipeline_mode<synchronous>, transform_indices = @transform_3, window_bounds = array<i64: 128, 128>}, {pipeline_mode = #tpu.pipeline_mode<synchronous>, transform_indices = @transform_4, window_bounds = array<i64: 1, 128>}, {pipeline_mode = #tpu.pipeline_mode<synchronous>, transform_indices = @transform_5, window_bounds = array<i64: 1, 128>}, {pipeline_mode = #tpu.pipeline_mode<synchronous>, transform_indices = @transform_6, window_bounds = array<i64: 1, 1>}, {transform_indices = @transform_7, window_bounds = array<i64: 1, 8>}]} {
    %c0 = arith.constant 0 : index
    %c0_0 = arith.constant 0 : index
    %0 = vector.load %arg1[%c0, %c0_0] : memref<8x32xf32, #tpu.memory_space<vmem>>, vector<8x32xf32>
    %c0_1 = arith.constant 0 : index
    %c0_2 = arith.constant 0 : index
    %1 = vector.load %arg2[%c0_1, %c0_2] : memref<32x128xf32, #tpu.memory_space<vmem>>, vector<32x128xf32>
    %c0_3 = arith.constant 0 : index
    %c0_4 = arith.constant 0 : index
    %2 = vector.load %arg3[%c0_3, %c0_4] : memref<1x128xf32, #tpu.memory_space<vmem>>, vector<1x128xf32>
    %cst = arith.constant dense<0.000000e+00> : vector<8x128xf32>
    %3 = tpu.matmul %0, %1, %cst {dimension_numbers = #tpu.dot_dimension_numbers<[1], [0], [0], [1], [0, 0, 1, 1], [], []>} : vector<8x32xf32>, vector<32x128xf32>, vector<8x128xf32> -> vector<8x128xf32>
    %4 = vector.broadcast %2 : vector<1x128xf32> to vector<8x128xf32>
    %5 = arith.addf %3, %4 : vector<8x128xf32>
    %cst_5 = arith.constant 0.00999999977 : f32
    %6 = vector.broadcast %cst_5 : f32 to vector<8x128xf32>
    %7 = arith.mulf %6, %5 : vector<8x128xf32>
    %8 = arith.maximumf %5, %7 : vector<8x128xf32>
    %c0_6 = arith.constant 0 : index
    %c0_7 = arith.constant 0 : index
    %9 = vector.load %arg4[%c0_6, %c0_7] : memref<128x128xf32, #tpu.memory_space<vmem>>, vector<128x128xf32>
    %c0_8 = arith.constant 0 : index
    %c0_9 = arith.constant 0 : index
    %10 = vector.load %arg5[%c0_8, %c0_9] : memref<1x128xf32, #tpu.memory_space<vmem>>, vector<1x128xf32>
    %cst_10 = arith.constant dense<0.000000e+00> : vector<8x128xf32>
    %11 = tpu.matmul %8, %9, %cst_10 {dimension_numbers = #tpu.dot_dimension_numbers<[1], [0], [0], [1], [0, 0, 1, 1], [], []>} : vector<8x128xf32>, vector<128x128xf32>, vector<8x128xf32> -> vector<8x128xf32>
    %12 = vector.broadcast %10 : vector<1x128xf32> to vector<8x128xf32>
    %13 = arith.addf %11, %12 : vector<8x128xf32>
    %cst_11 = arith.constant 0.00999999977 : f32
    %14 = vector.broadcast %cst_11 : f32 to vector<8x128xf32>
    %15 = arith.mulf %14, %13 : vector<8x128xf32>
    %16 = arith.maximumf %13, %15 : vector<8x128xf32>
    %c0_12 = arith.constant 0 : index
    %c0_13 = arith.constant 0 : index
    %17 = vector.load %arg6[%c0_12, %c0_13] : memref<1x128xf32, #tpu.memory_space<vmem>>, vector<1x128xf32>
    %c0_14 = arith.constant 0 : index
    %c0_15 = arith.constant 0 : index
    %18 = vector.load %arg7[%c0_14, %c0_15] : memref<1x1xf32, #tpu.memory_space<vmem>>, vector<1x1xf32>
    %cst_16 = arith.constant dense<0.000000e+00> : vector<1x8xf32>
    %19 = tpu.matmul %17, %16, %cst_16 {dimension_numbers = #tpu.dot_dimension_numbers<[1], [1], [0], [0], [0, 0, 1, 0], [], []>} : vector<1x128xf32>, vector<8x128xf32>, vector<1x8xf32> -> vector<1x8xf32>
    %20 = vector.broadcast %18 : vector<1x1xf32> to vector<1x8xf32>
    %21 = arith.addf %19, %20 : vector<1x8xf32>
    %c0_17 = arith.constant 0 : index
    %c0_18 = arith.constant 0 : index
    %22 = vector.load %arg8[%c0_17, %c0_18] : memref<1x8xf32, #tpu.memory_space<vmem>>, vector<1x8xf32>
    tpu.vector_store %arg8[%c0_17, %c0_18], %21 {strides = array<i32>} : memref<1x8xf32, #tpu.memory_space<vmem>>, vector<1x8xf32>,
    return
  }
  func.func @transform_0(%arg0: i32) -> (i32, i32) {
    %c0_i32 = arith.constant 0 : i32
    %c0_i32_0 = arith.constant 0 : i32
    return %arg0, %c0_i32 : i32, i32
  }
  func.func @transform_1(%arg0: i32) -> (i32, i32) {
    %c0_i32 = arith.constant 0 : i32
    %c0_i32_0 = arith.constant 0 : i32
    %c0_i32_1 = arith.constant 0 : i32
    return %c0_i32, %c0_i32_0 : i32, i32
  }
  func.func @transform_2(%arg0: i32) -> (i32, i32) {
    %c0_i32 = arith.constant 0 : i32
    %c0_i32_0 = arith.constant 0 : i32
    %c0_i32_1 = arith.constant 0 : i32
    return %c0_i32, %c0_i32_0 : i32, i32
  }
  func.func @transform_3(%arg0: i32) -> (i32, i32) {
    %c0_i32 = arith.constant 0 : i32
    %c0_i32_0 = arith.constant 0 : i32
    %c0_i32_1 = arith.constant 0 : i32
    return %c0_i32, %c0_i32_0 : i32, i32
  }
  func.func @transform_4(%arg0: i32) -> (i32, i32) {
    %c0_i32 = arith.constant 0 : i32
    %c0_i32_0 = arith.constant 0 : i32
    %c0_i32_1 = arith.constant 0 : i32
    return %c0_i32, %c0_i32_0 : i32, i32
  }
  func.func @transform_5(%arg0: i32) -> (i32, i32) {
    %c0_i32 = arith.constant 0 : i32
    %c0_i32_0 = arith.constant 0 : i32
    %c0_i32_1 = arith.constant 0 : i32
    return %c0_i32, %c0_i32_0 : i32, i32
  }
  func.func @transform_6(%arg0: i32) -> (i32, i32) {
    %c0_i32 = arith.constant 0 : i32
    %c0_i32_0 = arith.constant 0 : i32
    %c0_i32_1 = arith.constant 0 : i32
    return %c0_i32, %c0_i32_0 : i32, i32
  }
  func.func @transform_7(%arg0: i32) -> (i32, i32) {
    %c0_i32 = arith.constant 0 : i32
    %c0_i32_0 = arith.constant 0 : i32
    return %c0_i32, %arg0 : i32, i32
  }
}

</mosaic_0001>

<llo_original>
// kernel: critic_forward.1
$region0: #{critic_forward.1}
  #allocation0 [shape = 'u32[]', space=smem, size = 0x4, offset = 0x4, fixed_abs, tag = 'smem constant byte address 0x4 - core index']
  #allocation1 [shape = 'u32[144,128]{1,0:T(1,128)}', space=vmem, size = 0x12000, scoped, tag = 'internal scratch']
  #allocation2 [shape = 'f32[1,1]{1,0:T(1,128)S(1)}', space=vmem, size = 0x200, scoped, tag = 'scoped memory for critic_forward.1']
  %s0 = inlined_call_operand.vmem [shape: f32[8,32], index: 0, kind: input, shape index: {}]
  %s1 = inlined_call_operand.vmem [shape: f32[32,128], index: 1, kind: input, shape index: {}]
  %s2 = inlined_call_operand.vmem [shape: f32[1,128], index: 2, kind: input, shape index: {}]
  %s3 = inlined_call_operand.vmem [shape: f32[128,128], index: 3, kind: input, shape index: {}]
  %s4 = inlined_call_operand.vmem [shape: f32[1,128], index: 4, kind: input, shape index: {}]
  %s5 = inlined_call_operand.vmem [shape: f32[1,128], index: 5, kind: input, shape index: {}]
  %s6 = inlined_call_operand.<no memory space> [shape: f32[1,1], index: 6, kind: input, shape index: {}]
  %s7 = inlined_call_operand.hbm [shape: f32[1,8], index: 7, kind: output, shape index: {}]
  %s8 = sld [smem:[#allocation0]]
  $region38: #{critic_forward.1} parent=0
    _
  %s10 = ssub.s32 1, %s8
  %s11 = scalar_select 0, %s10, %s8
  %v12 = vstv %s6
  %13 = vst [vmem:[#allocation2] sm:$0x1] %v12
  $region1: #{critic_forward.1} parent=0
    #allocation3 [shape = 'u8[512]{0}', space=vmem, size = 0x400, scoped, tag = 'output window, operand 0, single buffered']
    #allocation4 [shape = 's32[1]{0}', space=sflag, size = 0x4, scoped, tag = 'scoped memory for critic_forward.1']
    %14 = vsyncpa [#allocation4], 0
    // Predicated region
    $region2: #{critic_forward.1} parent=1 // pred_check
      _
    $region3: #{critic_forward.1} parent=1 // pred_check_branch
      %16 = sbr.rel (0) target = $region5
    $region4: #{critic_forward.1} parent=1 // pred_region
      _
    $region5: #{critic_forward.1} parent=1 // pred_fallthru
      _
    // Predicated region
    $region6: #{critic_forward.1} parent=1 // pred_check
      _
    $region7: #{critic_forward.1} parent=1 // pred_check_branch
      %18 = sbr.rel (0) target = $region9
    $region8: #{critic_forward.1} parent=1 // pred_region
      _
    $region9: #{critic_forward.1} parent=1 // pred_fallthru
      _
    // Predicated region
    $region10: #{critic_forward.1} parent=1 // pred_check
      _
    $region11: #{critic_forward.1} parent=1 // pred_check_branch
      %20 = sbr.rel (0) target = $region13
    $region12: #{critic_forward.1} parent=1 // pred_region
      _
    $region13: #{critic_forward.1} parent=1 // pred_fallthru
      _
    // Predicated region
    $region14: #{critic_forward.1} parent=1 // pred_check
      _
    $region15: #{critic_forward.1} parent=1 // pred_check_branch
      %22 = sbr.rel (0) target = $region17
    $region16: #{critic_forward.1} parent=1 // pred_region
      _
    $region17: #{critic_forward.1} parent=1 // pred_fallthru
      _
    // Predicated region
    $region18: #{critic_forward.1} parent=1 // pred_check
      _
    $region19: #{critic_forward.1} parent=1 // pred_check_branch
      %24 = sbr.rel (0) target = $region21
    $region20: #{critic_forward.1} parent=1 // pred_region
      _
    $region21: #{critic_forward.1} parent=1 // pred_fallthru
      _
    // Predicated region
    $region22: #{critic_forward.1} parent=1 // pred_check
      _
    $region23: #{critic_forward.1} parent=1 // pred_check_branch
      %26 = sbr.rel (0) target = $region25
    $region24: #{critic_forward.1} parent=1 // pred_region
      _
    $region25: #{critic_forward.1} parent=1 // pred_fallthru
      _
    // Predicated region
    $region26: #{critic_forward.1} parent=1 // pred_check
      _
    $region27: #{critic_forward.1} parent=1 // pred_check_branch
      %28 = sbr.rel (0) target = $region29
    $region28: #{critic_forward.1} parent=1 // pred_region
      _
    $region29: #{critic_forward.1} parent=1 // pred_fallthru
      _
    %v29 = vld [vmem:[%s0] sm:$0xff]
    %v30 = vld [vmem:[%s1] sm:$0xff]
    %v31 = vld [vmem:[%s1 + $0x8] sm:$0xff]
    %v32 = vld [vmem:[%s1 + $0x10] sm:$0xff]
    %v33 = vld [vmem:[%s1 + $0x18] sm:$0xff]
    %v34 = vld [vmem:[%s2] sm:$0x1]
    %v36 = vlaneseq
    %v37 = vshrl.u32 %v36, 7
    %v38 = vsub.s32 0, %v37
    %v39 = vrot.slane %v34, %v38
    %vm41 = vcmask 261120
    %v43 = vsel %vm41, %v29, 0
    %45 = vmatprep.subr.mxu0 0.0
    %46 = vmatpush1.msra.mxu0 %v30
    %47 = vmatprep.subr.mxu0 0.0
    %48 = vmatpush1.msra.mxu0 %v31
    %49 = vmatprep.subr.mxu0 0.0
    %50 = vmatpush1.msra.mxu0 %v32
    %51 = vmatprep.subr.mxu0 0.0
    %52 = vmatpush1.msra.mxu0 %v33
    %53 = vmatprep.subr.mxu0 0.0
    %54 = vmatpush1.msra.mxu0 0.0
    %55 = vmatprep.subr.mxu0 0.0
    %56 = vmatpush1.msra.mxu0 0.0
    %57 = vmatprep.subr.mxu0 0.0
    %58 = vmatpush1.msra.mxu0 0.0
    %59 = vmatprep.subr.mxu0 0.0
    %60 = vmatpush1.msra.mxu0 0.0
    %61 = vmatprep.subr.mxu0 0.0
    %62 = vmatpush1.msra.mxu0 0.0
    %63 = vmatprep.subr.mxu0 0.0
    %64 = vmatpush1.msra.mxu0 0.0
    %65 = vmatprep.subr.mxu0 0.0
    %66 = vmatpush1.msra.mxu0 0.0
    %67 = vmatprep.subr.mxu0 0.0
    %68 = vmatpush1.msra.mxu0 0.0
    %69 = vmatprep.subr.mxu0 0.0
    %70 = vmatpush1.msra.mxu0 0.0
    %71 = vmatprep.subr.mxu0 0.0
    %72 = vmatpush1.msra.mxu0 0.0
    %73 = vmatprep.subr.mxu0 0.0
    %74 = vmatpush1.msra.mxu0 0.0
    %75 = vmatprep.subr.mxu0 0.0
    %76 = vmatpush1.msra.mxu0 0.0
    %77 = vmatprep.subr.mxu0 0.0
    %78 = vmatpush1.msra.mxu0 0.0
    %79 = vmatprep.subr.mxu0 0.0
    %80 = vmatpush1.msra.mxu0 0.0
    %81 = vmatprep.subr.mxu0 0.0
    %82 = vmatpush1.msra.mxu0 0.0
    %83 = vmatprep.subr.mxu0 0.0
    %84 = vmatpush1.msra.mxu0 0.0
    %85 = vmatprep.subr.mxu0 0.0
    %86 = vmatpush1.msra.mxu0 0.0
    %87 = vmatprep.subr.mxu0 0.0
    %88 = vmatpush1.msra.mxu0 0.0
    %89 = vmatprep.subr.mxu0 0.0
    %90 = vmatpush1.msra.mxu0 0.0
    %91 = vmatprep.subr.mxu0 0.0
    %92 = vmatpush1.msra.mxu0 0.0
    %93 = vmatprep.subr.mxu0 0.0
    %94 = vmatpush1.msra.mxu0 0.0
    %95 = vmatprep.subr.mxu0 0.0
    %96 = vmatpush1.msra.mxu0 0.0
    %97 = vmatprep.subr.mxu0 0.0
    %98 = vmatpush1.msra.mxu0 0.0
    %99 = vmatprep.subr.mxu0 0.0
    %100 = vmatpush1.msra.mxu0 0.0
    %101 = vmatprep.subr.mxu0 0.0
    %102 = vmatpush1.msra.mxu0 0.0
    %103 = vmatprep.subr.mxu0 0.0
    %104 = vmatpush1.msra.mxu0 0.0
    %105 = vmatprep.subr.mxu0 0.0
    %106 = vmatpush1.msra.mxu0 0.0
    %107 = vmatprep.subr.mxu0 0.0
    %108 = vmatpush1.msra.mxu0 0.0
    %109 = vmatprep.mubr.f32.mxu0 0.0
    %110 = vmatmul.mubr.f32.gmra.mrb[0].mxu0 %v43
    %v111 = vpop.f32.mrb[0].mxu0
    %v112 = vadd.f32 %v39, %v111
    %v113 = vpop.f32.mrb[0].mxu0
    %114 = vdwg.mxu0
    %v115 = vmul.f32 %v112, 0.01
    %v116 = vmax.f32 %v112, %v115
    %v117 = vld [vmem:[%s3] sm:$0xff]
    %v118 = vld [vmem:[%s3 + $0x8] sm:$0xff]
    %v119 = vld [vmem:[%s3 + $0x10] sm:$0xff]
    %v120 = vld [vmem:[%s3 + $0x18] sm:$0xff]
    %v121 = vld [vmem:[%s3 + $0x20] sm:$0xff]
    %v122 = vld [vmem:[%s3 + $0x28] sm:$0xff]
    %v123 = vld [vmem:[%s3 + $0x30] sm:$0xff]
    %v124 = vld [vmem:[%s3 + $0x38] sm:$0xff]
    %v125 = vld [vmem:[%s3 + $0x40] sm:$0xff]
    %v126 = vld [vmem:[%s3 + $0x48] sm:$0xff]
    %v127 = vld [vmem:[%s3 + $0x50] sm:$0xff]
    %v128 = vld [vmem:[%s3 + $0x58] sm:$0xff]
    %v129 = vld [vmem:[%s3 + $0x60] sm:$0xff]
    %v130 = vld [vmem:[%s3 + $0x68] sm:$0xff]
    %v131 = vld [vmem:[%s3 + $0x70] sm:$0xff]
    %v132 = vld [vmem:[%s3 + $0x78] sm:$0xff]
    %v133 = vld [vmem:[%s4] sm:$0x1]
    %v135 = vlaneseq
    %v136 = vshrl.u32 %v135, 7
    %v137 = vsub.s32 0, %v136
    %v138 = vrot.slane %v133, %v137
    %140 = vmatprep.subr.mxu0 0.0
    %141 = vmatpush1.msra.mxu0 %v117
    %142 = vmatprep.subr.mxu0 0.0
    %143 = vmatpush1.msra.mxu0 %v118
    %144 = vmatprep.subr.mxu0 0.0
    %145 = vmatpush1.msra.mxu0 %v119
    %146 = vmatprep.subr.mxu0 0.0
    %147 = vmatpush1.msra.mxu0 %v120
    %148 = vmatprep.subr.mxu0 0.0
    %149 = vmatpush1.msra.mxu0 %v121
    %150 = vmatprep.subr.mxu0 0.0
    %151 = vmatpush1.msra.mxu0 %v122
    %152 = vmatprep.subr.mxu0 0.0
    %153 = vmatpush1.msra.mxu0 %v123
    %154 = vmatprep.subr.mxu0 0.0
    %155 = vmatpush1.msra.mxu0 %v124
    %156 = vmatprep.subr.mxu0 0.0
    %157 = vmatpush1.msra.mxu0 %v125
    %158 = vmatprep.subr.mxu0 0.0
    %159 = vmatpush1.msra.mxu0 %v126
    %160 = vmatprep.subr.mxu0 0.0
    %161 = vmatpush1.msra.mxu0 %v127
    %162 = vmatprep.subr.mxu0 0.0
    %163 = vmatpush1.msra.mxu0 %v128
    %164 = vmatprep.subr.mxu0 0.0
    %165 = vmatpush1.msra.mxu0 %v129
    %166 = vmatprep.subr.mxu0 0.0
    %167 = vmatpush1.msra.mxu0 %v130
    %168 = vmatprep.subr.mxu0 0.0
    %169 = vmatpush1.msra.mxu0 %v131
    %170 = vmatprep.subr.mxu0 0.0
    %171 = vmatpush1.msra.mxu0 %v132
    %172 = vmatprep.subr.mxu0 0.0
    %173 = vmatpush1.msra.mxu0 0.0
    %174 = vmatprep.subr.mxu0 0.0
    %175 = vmatpush1.msra.mxu0 0.0
    %176 = vmatprep.subr.mxu0 0.0
    %177 = vmatpush1.msra.mxu0 0.0
    %178 = vmatprep.subr.mxu0 0.0
    %179 = vmatpush1.msra.mxu0 0.0
    %180 = vmatprep.subr.mxu0 0.0
    %181 = vmatpush1.msra.mxu0 0.0
    %182 = vmatprep.subr.mxu0 0.0
    %183 = vmatpush1.msra.mxu0 0.0
    %184 = vmatprep.subr.mxu0 0.0
    %185 = vmatpush1.msra.mxu0 0.0
    %186 = vmatprep.subr.mxu0 0.0
    %187 = vmatpush1.msra.mxu0 0.0
    %188 = vmatprep.subr.mxu0 0.0
    %189 = vmatpush1.msra.mxu0 0.0
    %190 = vmatprep.subr.mxu0 0.0
    %191 = vmatpush1.msra.mxu0 0.0
    %192 = vmatprep.subr.mxu0 0.0
    %193 = vmatpush1.msra.mxu0 0.0
    %194 = vmatprep.subr.mxu0 0.0
    %195 = vmatpush1.msra.mxu0 0.0
    %196 = vmatprep.subr.mxu0 0.0
    %197 = vmatpush1.msra.mxu0 0.0
    %198 = vmatprep.subr.mxu0 0.0
    %199 = vmatpush1.msra.mxu0 0.0
    %200 = vmatprep.subr.mxu0 0.0
    %201 = vmatpush1.msra.mxu0 0.0
    %202 = vmatprep.subr.mxu0 0.0
    %203 = vmatpush1.msra.mxu0 0.0
    %204 = vmatprep.mubr.f32.mxu0 0.0
    %205 = vmatmul.mubr.f32.gmra.mrb[0].mxu0 %v116
    %v206 = vpop.f32.mrb[0].mxu0
    %v207 = vadd.f32 %v138, %v206
    %v208 = vpop.f32.mrb[0].mxu0
    %209 = vdwg.mxu0
    %v210 = vmul.f32 %v207, 0.01
    %v211 = vmax.f32 %v207, %v210
    %v212 = vld [vmem:[%s5] sm:$0x1]
    %v213 = vld [vmem:[#allocation2] sm:$0x1]
    %215 = vset.pattern.permute.xlu0 0
    %216 = vperm.xlu0 %215, %v213
    %v217 = vpop.permute.xlu0 %216
    %v219 = vlaneseq
    %v220 = vshrl.u32 %v219, 7
    %v221 = vsub.s32 0, %v220
    %v222 = vrot.slane %v217, %v221
    %223 = vmatprep.subr.mxu0 0.0
    %224 = vmatpush1.xpose.msra.mxu0 %v211
    %225 = vmatprep.subr.mxu0 0.0
    %226 = vmatpush1.xpose.msra.mxu0 0.0
    %227 = vmatprep.subr.mxu0 0.0
    %228 = vmatpush1.xpose.msra.mxu0 0.0
    %229 = vmatprep.subr.mxu0 0.0
    %230 = vmatpush1.xpose.msra.mxu0 0.0
    %231 = vmatprep.subr.mxu0 0.0
    %232 = vmatpush1.xpose.msra.mxu0 0.0
    %233 = vmatprep.subr.mxu0 0.0
    %234 = vmatpush1.xpose.msra.mxu0 0.0
    %235 = vmatprep.subr.mxu0 0.0
    %236 = vmatpush1.xpose.msra.mxu0 0.0
    %237 = vmatprep.subr.mxu0 0.0
    %238 = vmatpush1.xpose.msra.mxu0 0.0
    %239 = vmatprep.subr.mxu0 0.0
    %240 = vmatpush1.xpose.msra.mxu0 0.0
    %241 = vmatprep.subr.mxu0 0.0
    %242 = vmatpush1.xpose.msra.mxu0 0.0
    %243 = vmatprep.subr.mxu0 0.0
    %244 = vmatpush1.xpose.msra.mxu0 0.0
    %245 = vmatprep.subr.mxu0 0.0
    %246 = vmatpush1.xpose.msra.mxu0 0.0
    %247 = vmatprep.subr.mxu0 0.0
    %248 = vmatpush1.xpose.msra.mxu0 0.0
    %249 = vmatprep.subr.mxu0 0.0
    %250 = vmatpush1.xpose.msra.mxu0 0.0
    %251 = vmatprep.subr.mxu0 0.0
    %252 = vmatpush1.xpose.msra.mxu0 0.0
    %253 = vmatprep.subr.mxu0 0.0
    %254 = vmatpush1.xpose.msra.mxu0 0.0
    %255 = vmatprep.subr.mxu0 0.0
    %256 = vmatpush1.xpose.msra.mxu0 0.0
    %257 = vmatprep.subr.mxu0 0.0
    %258 = vmatpush1.xpose.msra.mxu0 0.0
    %259 = vmatprep.subr.mxu0 0.0
    %260 = vmatpush1.xpose.msra.mxu0 0.0
    %261 = vmatprep.subr.mxu0 0.0
    %262 = vmatpush1.xpose.msra.mxu0 0.0
    %263 = vmatprep.subr.mxu0 0.0
    %264 = vmatpush1.xpose.msra.mxu0 0.0
    %265 = vmatprep.subr.mxu0 0.0
    %266 = vmatpush1.xpose.msra.mxu0 0.0
    %267 = vmatprep.subr.mxu0 0.0
    %268 = vmatpush1.xpose.msra.mxu0 0.0
    %269 = vmatprep.subr.mxu0 0.0
    %270 = vmatpush1.xpose.msra.mxu0 0.0
    %271 = vmatprep.subr.mxu0 0.0
    %272 = vmatpush1.xpose.msra.mxu0 0.0
    %273 = vmatprep.subr.mxu0 0.0
    %274 = vmatpush1.xpose.msra.mxu0 0.0
    %275 = vmatprep.subr.mxu0 0.0
    %276 = vmatpush1.xpose.msra.mxu0 0.0
    %277 = vmatprep.subr.mxu0 0.0
    %278 = vmatpush1.xpose.msra.mxu0 0.0
    %279 = vmatprep.subr.mxu0 0.0
    %280 = vmatpush1.xpose.msra.mxu0 0.0
    %281 = vmatprep.subr.mxu0 0.0
    %282 = vmatpush1.xpose.msra.mxu0 0.0
    %283 = vmatprep.subr.mxu0 0.0
    %284 = vmatpush1.xpose.msra.mxu0 0.0
    %285 = vmatprep.subr.mxu0 0.0
    %286 = vmatpush1.xpose.msra.mxu0 0.0
    %287 = vmatprep.mubr.f32.mxu0 0.0
    %288 = vmatmul.mubr.f32.gmra.mrb[0].mxu0 %v212
    %v289 = vpop.f32.mrb[0].mxu0
    %v290 = vadd.f32 %v222, %v289
    %v291 = vpop.f32.mrb[0].mxu0
    %292 = vdwg.mxu0
    %vm293 = vcmask 57344
    %294 = vst.msk [vmem:[#allocation3] sm:$0x1] %vm293, %v290
    // Predicated region
    $region30: #{critic_forward.1} parent=1 // pred_check
      _
    $region31: #{critic_forward.1} parent=1 // pred_check_branch
      %296 = sbr.rel (0) target = $region33
    $region32: #{critic_forward.1} parent=1 // pred_region
      %s298 = ssub.s32 16, 16
      %299 = vsyncadd [#allocation4], %s298
      %s301 = sshll.u32 [#allocation3], 4
      %s302 = int_to_ptr.vmem [resolvable:$true] %s301
      %304 = dma.vmem_to_hbm [thread:$0]  %s302, 16, %s7, [#allocation4]
    $region33: #{critic_forward.1} parent=1 // pred_fallthru
      _
    // Predicated region
    $region34: #{critic_forward.1} parent=1 // pred_check
      _
    $region35: #{critic_forward.1} parent=1 // pred_check_branch
      %306 = sbr.rel (0) target = $region37
    $region36: #{critic_forward.1} parent=1 // pred_region
      %307 = dma.done [#allocation4], 16
    $region37: #{critic_forward.1} parent=1 // pred_fallthru
      _
    %308 = vsyncpa [#allocation4], 1

</llo_original>
